<compile_context>
chip_gen: v5e
topology: v5e:2x2
jax: 0.10.0
libtpu: 0.0.40
codegen_flags: <defaults>
</compile_context>

<pallas_src>
import functools

import jax
import jax.numpy as jnp
from jax.experimental import pallas as pl
from jax.experimental.pallas import tpu as pltpu

AA = 50.0          # `aa` in the reference
D_GEOM = 28.0      # `d` in the reference
SQRT3 = 3.0 ** 0.5
HIDDEN = 64
CONTROL_DIM = 3


def _angle_to_length(a):
    # 1.327e-10 a^5 - 7.894e-8 a^4 + 1.314e-5 a^3 - 1.259e-3 a^2 - 0.1502 a + 80.92
    return ((((1.327e-10 * a - 7.894e-08) * a + 1.314e-05) * a
             - 0.001259) * a - 0.1502) * a + 80.92


def _pcc_physics_rows(q1, q2, q3, *, approx_recip):
    """Closed-form end-effector solution; q1/q2/q3 and outputs are (1, TB) rows."""
    degen = (jnp.abs(q1 - q2) < 1e-6) & (jnp.abs(q2 - q3) < 1e-6)

    S = (q1 + q2 + q3) * (1.0 / 3.0)          # = theta / k
    Ac = (q2 - q3) * (1.0 / SQRT3)            # = theta * d * cos(phi)
    As = (q2 + q3 - 2.0 * q1) * (1.0 / 3.0)   # = theta * d * sin(phi)
    A = jnp.sqrt(Ac * Ac + As * As)           # = theta * d   (theta >= 0 branch)
    A_safe = jnp.where(degen, 1.0, A)

    if approx_recip:
        inv_A = pl.reciprocal(A_safe, approx=True)   # one shared EUP reciprocal
    else:
        inv_A = 1.0 / A_safe                         # pure-JAX reference path
    theta = A_safe * (1.0 / D_GEOM)
    inv_theta = D_GEOM * inv_A                       # 1/theta = d / A
    cos_phi = Ac * inv_A
    sin_phi = As * inv_A
    S_abs = jnp.abs(S)                               # 1/k_eff = |S| / theta

    sin_t = jnp.sin(theta)
    cos_t = jnp.cos(theta)
    half = jnp.sin(0.5 * theta)
    r0 = S_abs * (2.0 * half * half) * inv_theta     # (1-cos t)/k_eff, cancellation-free
    z0 = S_abs * sin_t * inv_theta                   # sin t / k_eff
    radial = r0 + AA * sin_t

    px = jnp.where(degen, 0.0, radial * cos_phi)
    py = jnp.where(degen, 0.0, radial * sin_phi)
    pz = jnp.where(degen, q1 + AA, z0 + AA * cos_t)
    return px, py, pz


def _hybrid_kernel(encu_ref, xu_ref,
                   w1_ref, b1_ref, w2_ref, b2_ref,
                   w3_ref, b3_ref, w4_ref, b4_ref, out_ref):
    # Feature-major: rows = features (sublanes), cols = batch tile (lanes).
    encu = encu_ref[...]                     # (6, TB) f32: rows 0:3 = enc, 3:6 = u

    # ---- encoder update + cable-length polynomial (lane-dense VPU work) ----
    next_enc = encu[0:3, :] + encu[3:6, :]
    q = _angle_to_length(next_enc)           # (3, TB)

    # ---- physics (PCC forward kinematics), f32 ----
    px, py, pz = _pcc_physics_rows(q[0:1, :], q[1:2, :], q[2:3, :],
                                   approx_recip=True)

    # ---- residual MLP: fused K=6 first layer, bf16 MXU, f32 acc, bf16 hiddens ----
    xu = xu_ref[...]                         # (6, TB) bf16, pre-cast in the wrapper
    h = jnp.dot(w1_ref[...], xu, preferred_element_type=jnp.float32)
    h = jnp.maximum(h + b1_ref[...], 0.0).astype(jnp.bfloat16)
    h = jnp.dot(w2_ref[...], h, preferred_element_type=jnp.float32)
    h = jnp.maximum(h + b2_ref[...], 0.0).astype(jnp.bfloat16)
    h = jnp.dot(w3_ref[...], h, preferred_element_type=jnp.float32)
    h = jnp.maximum(h + b3_ref[...], 0.0).astype(jnp.bfloat16)
    delta = jnp.dot(w4_ref[...], h, preferred_element_type=jnp.float32) + b4_ref[...]

    # ---- two slice stores: encoder rows and a single (3, TB) xyz row-block ----
    out_ref[0:3, :] = next_enc
    phys = jnp.concatenate([px, py, pz], axis=0)          # (3, TB)
    out_ref[3:6, :] = phys + delta


def _round_up(n, m):
    return ((n + m - 1) // m) * m


@functools.lru_cache(maxsize=None)
def _gen_config():
    """(max batch-tile lanes, vmem_limit_bytes), branched on TPU generation."""
    try:
        vmem = int(pltpu.get_tpu_info().vmem_capacity_bytes)
    except Exception:
        return 8192, 32 * 1024 * 1024                     # conservative fallback
    if vmem >= 100 * 1024 * 1024:                         # v5e / v6e: 128 MiB VMEM
        return 32768, 96 * 1024 * 1024
    return 16384, 48 * 1024 * 1024                        # v7x: 64 MiB VMEM


@functools.partial(jax.jit, static_argnames=("block_b",))
def hybrid_dynamics_forward(x, u, params, *, block_b=None):
    """x: (B, 6), u: (B, 3) -> (B, 6).  Wrapper does layout plumbing only."""
    B = x.shape[0]
    x = x.astype(jnp.float32)
    u = u.astype(jnp.float32)

    # Generation-aware tile cap / VMEM limit; tile is a multiple of 128 lanes.
    cap, vmem_limit = _gen_config()
    if block_b is not None:
        cap = min(cap, int(block_b))
    cap = max(128, (cap // 128) * 128)

    tb = min(cap, _round_up(B, 128))
    # Keep >= 2 grid steps when the batch allows it so v7x megacore gets work.
    if B > 256 and _round_up(B, tb) // tb < 2:
        tb = min(cap, _round_up((B + 1) // 2, 128))
    bp = _round_up(B, tb)
    pad = bp - B

    xp = jnp.pad(x, ((0, pad), (0, 0)))
    up = jnp.pad(u, ((0, pad), (0, 0)))

    # Two staging arrays (u duplicated only once, second copy is half-width bf16):
    encu_t = jnp.concatenate([xp[:, 0:3], up], axis=-1).T                 # (6, Bp) f32
    xu_t = jnp.concatenate([xp[:, 3:6], up], axis=-1).T.astype(jnp.bfloat16)  # (6, Bp)

    w1 = params["w1"].astype(jnp.bfloat16)
    w2 = params["w2"].astype(jnp.bfloat16)
    w3 = params["w3"].astype(jnp.bfloat16)
    w4 = params["w4"].astype(jnp.bfloat16)
    b1, b2, b3, b4 = (params["b1"], params["b2"], params["b3"], params["b4"])

    def batch_spec(rows):
        return pl.BlockSpec((rows, tb), lambda i: (0, i))

    def const_spec(shape):
        return pl.BlockSpec(shape, lambda i: (0, 0))      # resident across grid steps

    out_t = pl.pallas_call(
        _hybrid_kernel,
        out_shape=jax.ShapeDtypeStruct((6, bp), jnp.float32),
        grid=(bp // tb,),
        in_specs=[
            batch_spec(6),                                 # [enc; u]^T   f32
            batch_spec(6),                                 # [xyz; u]^T   bf16
            const_spec((HIDDEN, 3 + CONTROL_DIM)), const_spec((HIDDEN, 1)),
            const_spec((HIDDEN, HIDDEN)), const_spec((HIDDEN, 1)),
            const_spec((HIDDEN, HIDDEN)), const_spec((HIDDEN, 1)),
            const_spec((3, HIDDEN)), const_spec((3, 1)),
        ],
        out_specs=batch_spec(6),
        compiler_params=pltpu.CompilerParams(
            dimension_semantics=("parallel",),             # megacore sharding on v7x
            vmem_limit_bytes=vmem_limit,
        ),
    )(encu_t, xu_t, w1, b1, w2, b2, w3, b3, w4, b4)

    return out_t[:, :B].T                                  # slice before transposing


def init_params(key, control_dim=CONTROL_DIM, hidden=HIDDEN):
    """Deterministic params, mimicking nn.Linear's U(-1/sqrt(fan_in), ...).

    Weights are stored feature-major-ready as (out, in); biases as (out, 1).
    """
    ks = jax.random.split(key, 8)

    def lin(kw, kb, fan_in, fan_out):
        bound = 1.0 / (fan_in ** 0.5)
        w = jax.random.uniform(kw, (fan_out, fan_in), jnp.float32, -bound, bound)
        b = jax.random.uniform(kb, (fan_out, 1), jnp.float32, -bound, bound)
        return w, b

    w1, b1 = lin(ks[0], ks[1], 3 + control_dim, hidden)
    w2, b2 = lin(ks[2], ks[3], hidden, hidden)
    w3, b3 = lin(ks[4], ks[5], hidden, hidden)
    w4, b4 = lin(ks[6], ks[7], hidden, 3)
    return {"w1": w1, "b1": b1, "w2": w2, "b2": b2,
            "w3": w3, "b3": b3, "w4": w4, "b4": b4}


def reference_forward(x, u, p):
    """Pure-JAX f32 reference (exact divisions, f32 MLP) for validation."""
    x = x.astype(jnp.float32)
    u = u.astype(jnp.float32)
    enc, xyz = x[:, :3], x[:, 3:]
    next_enc = enc + u
    q = _angle_to_length(next_enc)
    px, py, pz = _pcc_physics_rows(q[:, 0:1].T, q[:, 1:2].T, q[:, 2:3].T,
                                   approx_recip=False)
    phys = jnp.concatenate([px, py, pz], axis=0).T          # (B, 3)
    xu = jnp.concatenate([xyz, u], axis=-1)
    h = jax.nn.relu(xu @ p["w1"].T + p["b1"].T)
    h = jax.nn.relu(h @ p["w2"].T + p["b2"].T)
    h = jax.nn.relu(h @ p["w3"].T + p["b3"].T)
    delta = h @ p["w4"].T + p["b4"].T
    return jnp.concatenate([next_enc, phys + delta], axis=-1)


def _make_inputs(k, B):
    # encoder angles in [0, 40] deg-ish, previous xyz small, controls small.
    enc0 = jax.random.uniform(jax.random.fold_in(k, 0), (B, 3), jnp.float32, 0.0, 40.0)
    xyz0 = jax.random.uniform(jax.random.fold_in(k, 1), (B, 3), jnp.float32, -5.0, 5.0)
    uu = jax.random.uniform(jax.random.fold_in(k, 2), (B, CONTROL_DIM),
                            jnp.float32, -2.0, 2.0)
    return jnp.concatenate([enc0, xyz0], axis=-1), uu


if __name__ == "__main__":
    key = jax.random.PRNGKey(0)
    k_a, k_b, k_p = jax.random.split(key, 3)
    params = init_params(k_p)

    # Small-shape check (single grid step).
    x, u = _make_inputs(k_a, 8)
    out = jax.block_until_ready(hybrid_dynamics_forward(x, u, params))
    ref = reference_forward(x, u, params)
    assert out.shape == (8, 6) and out.dtype == jnp.float32
    assert bool(jnp.all(jnp.isfinite(out)))
    assert bool(jnp.allclose(out, ref, rtol=1e-2, atol=1e-1)), (out, ref)

    # Padding + multi-step grid check (exercises the >=2-step megacore path).
    x2, u2 = _make_inputs(k_b, 300)
    out2 = jax.block_until_ready(hybrid_dynamics_forward(x2, u2, params))
    ref2 = reference_forward(x2, u2, params)
    assert out2.shape == (300, 6)
    assert bool(jnp.all(jnp.isfinite(out2)))
    assert bool(jnp.allclose(out2, ref2, rtol=1e-2, atol=1e-1)), (out2, ref2)

    print("KERNEL_OK")
</pallas_src>

<mosaic_0001>
module attributes {stable_mosaic.version = 11 : i64} {
  func.func @_hybrid_kernel(%arg0: i32, %arg1: memref<6x128xf32, #tpu.memory_space<vmem>>, %arg2: memref<6x128xbf16, #tpu.memory_space<vmem>>, %arg3: memref<64x6xbf16, #tpu.memory_space<vmem>>, %arg4: memref<64x1xf32, #tpu.memory_space<vmem>>, %arg5: memref<64x64xbf16, #tpu.memory_space<vmem>>, %arg6: memref<64x1xf32, #tpu.memory_space<vmem>>, %arg7: memref<64x64xbf16, #tpu.memory_space<vmem>>, %arg8: memref<64x1xf32, #tpu.memory_space<vmem>>, %arg9: memref<3x64xbf16, #tpu.memory_space<vmem>>, %arg10: memref<3x1xf32, #tpu.memory_space<vmem>>, %arg11: memref<6x128xf32, #tpu.memory_space<vmem>>) attributes {dimension_semantics = [#tpu.dimension_semantics<parallel>], iteration_bounds = array<i64: 1>, scalar_prefetch = 0 : i64, scratch_operands = 0 : i64, tpu.core_type = #tpu.core_type<tc>, window_params = [{transform_indices = @transform_0, window_bounds = array<i64: 6, 128>}, {transform_indices = @transform_1, window_bounds = array<i64: 6, 128>}, {pipeline_mode = #tpu.pipeline_mode<synchronous>, transform_indices = @transform_2, window_bounds = array<i64: 64, 6>}, {pipeline_mode = #tpu.pipeline_mode<synchronous>, transform_indices = @transform_3, window_bounds = array<i64: 64, 1>}, {pipeline_mode = #tpu.pipeline_mode<synchronous>, transform_indices = @transform_4, window_bounds = array<i64: 64, 64>}, {pipeline_mode = #tpu.pipeline_mode<synchronous>, transform_indices = @transform_5, window_bounds = array<i64: 64, 1>}, {pipeline_mode = #tpu.pipeline_mode<synchronous>, transform_indices = @transform_6, window_bounds = array<i64: 64, 64>}, {pipeline_mode = #tpu.pipeline_mode<synchronous>, transform_indices = @transform_7, window_bounds = array<i64: 64, 1>}, {pipeline_mode = #tpu.pipeline_mode<synchronous>, transform_indices = @transform_8, window_bounds = array<i64: 3, 64>}, {pipeline_mode = #tpu.pipeline_mode<synchronous>, transform_indices = @transform_9, window_bounds = array<i64: 3, 1>}, {transform_indices = @transform_10, window_bounds = array<i64: 6, 128>}]} {
    %c0 = arith.constant 0 : index
    %c0_0 = arith.constant 0 : index
    %0 = vector.load %arg1[%c0, %c0_0] : memref<6x128xf32, #tpu.memory_space<vmem>>, vector<6x128xf32>
    %1 = vector.extract_strided_slice %0 {offsets = [0, 0], sizes = [3, 128], strides = [1, 1]} : vector<6x128xf32> to vector<3x128xf32>
    %2 = vector.extract_strided_slice %0 {offsets = [3, 0], sizes = [3, 128], strides = [1, 1]} : vector<6x128xf32> to vector<3x128xf32>
    %3 = arith.addf %1, %2 : vector<3x128xf32>
    %cst = arith.constant 1.327000e-10 : f32
    %4 = vector.broadcast %cst : f32 to vector<3x128xf32>
    %5 = arith.mulf %4, %3 : vector<3x128xf32>
    %cst_1 = arith.constant 7.89399976E-8 : f32
    %6 = vector.broadcast %cst_1 : f32 to vector<3x128xf32>
    %7 = arith.subf %5, %6 : vector<3x128xf32>
    %8 = arith.mulf %7, %3 : vector<3x128xf32>
    %cst_2 = arith.constant 1.314000e-05 : f32
    %9 = vector.broadcast %cst_2 : f32 to vector<3x128xf32>
    %10 = arith.addf %8, %9 : vector<3x128xf32>
    %11 = arith.mulf %10, %3 : vector<3x128xf32>
    %cst_3 = arith.constant 1.259000e-03 : f32
    %12 = vector.broadcast %cst_3 : f32 to vector<3x128xf32>
    %13 = arith.subf %11, %12 : vector<3x128xf32>
    %14 = arith.mulf %13, %3 : vector<3x128xf32>
    %cst_4 = arith.constant 1.502000e-01 : f32
    %15 = vector.broadcast %cst_4 : f32 to vector<3x128xf32>
    %16 = arith.subf %14, %15 : vector<3x128xf32>
    %17 = arith.mulf %16, %3 : vector<3x128xf32>
    %cst_5 = arith.constant 80.9199981 : f32
    %18 = vector.broadcast %cst_5 : f32 to vector<3x128xf32>
    %19 = arith.addf %17, %18 : vector<3x128xf32>
    %20 = vector.extract_strided_slice %19 {offsets = [0, 0], sizes = [1, 128], strides = [1, 1]} : vector<3x128xf32> to vector<1x128xf32>
    %21 = vector.extract_strided_slice %19 {offsets = [1, 0], sizes = [1, 128], strides = [1, 1]} : vector<3x128xf32> to vector<1x128xf32>
    %22 = vector.extract_strided_slice %19 {offsets = [2, 0], sizes = [1, 128], strides = [1, 1]} : vector<3x128xf32> to vector<1x128xf32>
    %23 = arith.subf %20, %21 : vector<1x128xf32>
    %24 = math.absf %23 : vector<1x128xf32>
    %cst_6 = arith.constant 9.99999997E-7 : f32
    %25 = vector.broadcast %cst_6 : f32 to vector<1x128xf32>
    %26 = arith.cmpf olt, %24, %25 : vector<1x128xf32>
    %27 = arith.subf %21, %22 : vector<1x128xf32>
    %28 = math.absf %27 : vector<1x128xf32>
    %cst_7 = arith.constant 9.99999997E-7 : f32
    %29 = vector.broadcast %cst_7 : f32 to vector<1x128xf32>
    %30 = arith.cmpf olt, %28, %29 : vector<1x128xf32>
    %31 = arith.andi %26, %30 : vector<1x128xi1>
    %32 = arith.addf %20, %21 : vector<1x128xf32>
    %33 = arith.addf %32, %22 : vector<1x128xf32>
    %cst_8 = arith.constant 0.333333343 : f32
    %34 = vector.broadcast %cst_8 : f32 to vector<1x128xf32>
    %35 = arith.mulf %33, %34 : vector<1x128xf32>
    %36 = arith.subf %21, %22 : vector<1x128xf32>
    %cst_9 = arith.constant 0.577350259 : f32
    %37 = vector.broadcast %cst_9 : f32 to vector<1x128xf32>
    %38 = arith.mulf %36, %37 : vector<1x128xf32>
    %39 = arith.addf %21, %22 : vector<1x128xf32>
    %cst_10 = arith.constant 2.000000e+00 : f32
    %40 = vector.broadcast %cst_10 : f32 to vector<1x128xf32>
    %41 = arith.mulf %40, %20 : vector<1x128xf32>
    %42 = arith.subf %39, %41 : vector<1x128xf32>
    %cst_11 = arith.constant 0.333333343 : f32
    %43 = vector.broadcast %cst_11 : f32 to vector<1x128xf32>
    %44 = arith.mulf %42, %43 : vector<1x128xf32>
    %45 = arith.mulf %38, %38 : vector<1x128xf32>
    %46 = arith.mulf %44, %44 : vector<1x128xf32>
    %47 = arith.addf %45, %46 : vector<1x128xf32>
    %48 = math.sqrt %47 : vector<1x128xf32>
    %cst_12 = arith.constant 1.000000e+00 : f32
    %49 = vector.broadcast %cst_12 : f32 to vector<1x128xf32>
    %50 = arith.select %31, %49, %48 : vector<1x128xi1>, vector<1x128xf32>
    %51 = tpu.reciprocal %50 {approx = true} : vector<1x128xf32> -> vector<1x128xf32>
    %cst_13 = arith.constant 0.0357142873 : f32
    %52 = vector.broadcast %cst_13 : f32 to vector<1x128xf32>
    %53 = arith.mulf %50, %52 : vector<1x128xf32>
    %cst_14 = arith.constant 2.800000e+01 : f32
    %54 = vector.broadcast %cst_14 : f32 to vector<1x128xf32>
    %55 = arith.mulf %54, %51 : vector<1x128xf32>
    %56 = arith.mulf %38, %51 : vector<1x128xf32>
    %57 = arith.mulf %44, %51 : vector<1x128xf32>
    %58 = math.absf %35 : vector<1x128xf32>
    %59 = math.sin %53 : vector<1x128xf32>
    %60 = math.cos %53 : vector<1x128xf32>
    %cst_15 = arith.constant 5.000000e-01 : f32
    %61 = vector.broadcast %cst_15 : f32 to vector<1x128xf32>
    %62 = arith.mulf %61, %53 : vector<1x128xf32>
    %63 = math.sin %62 : vector<1x128xf32>
    %cst_16 = arith.constant 2.000000e+00 : f32
    %64 = vector.broadcast %cst_16 : f32 to vector<1x128xf32>
    %65 = arith.mulf %64, %63 : vector<1x128xf32>
    %66 = arith.mulf %65, %63 : vector<1x128xf32>
    %67 = arith.mulf %58, %66 : vector<1x128xf32>
    %68 = arith.mulf %67, %55 : vector<1x128xf32>
    %69 = arith.mulf %58, %59 : vector<1x128xf32>
    %70 = arith.mulf %69, %55 : vector<1x128xf32>
    %cst_17 = arith.constant 5.000000e+01 : f32
    %71 = vector.broadcast %cst_17 : f32 to vector<1x128xf32>
    %72 = arith.mulf %71, %59 : vector<1x128xf32>
    %73 = arith.addf %68, %72 : vector<1x128xf32>
    %74 = arith.mulf %73, %56 : vector<1x128xf32>
    %cst_18 = arith.constant 0.000000e+00 : f32
    %75 = vector.broadcast %cst_18 : f32 to vector<1x128xf32>
    %76 = arith.select %31, %75, %74 : vector<1x128xi1>, vector<1x128xf32>
    %77 = arith.mulf %73, %57 : vector<1x128xf32>
    %cst_19 = arith.constant 0.000000e+00 : f32
    %78 = vector.broadcast %cst_19 : f32 to vector<1x128xf32>
    %79 = arith.select %31, %78, %77 : vector<1x128xi1>, vector<1x128xf32>
    %cst_20 = arith.constant 5.000000e+01 : f32
    %80 = vector.broadcast %cst_20 : f32 to vector<1x128xf32>
    %81 = arith.addf %20, %80 : vector<1x128xf32>
    %cst_21 = arith.constant 5.000000e+01 : f32
    %82 = vector.broadcast %cst_21 : f32 to vector<1x128xf32>
    %83 = arith.mulf %82, %60 : vector<1x128xf32>
    %84 = arith.addf %70, %83 : vector<1x128xf32>
    %85 = arith.select %31, %81, %84 : vector<1x128xi1>, vector<1x128xf32>
    %c0_22 = arith.constant 0 : index
    %c0_23 = arith.constant 0 : index
    %86 = vector.load %arg2[%c0_22, %c0_23] : memref<6x128xbf16, #tpu.memory_space<vmem>>, vector<6x128xbf16>
    %c0_24 = arith.constant 0 : index
    %c0_25 = arith.constant 0 : index
    %87 = vector.load %arg3[%c0_24, %c0_25] : memref<64x6xbf16, #tpu.memory_space<vmem>>, vector<64x6xbf16>
    %cst_26 = arith.constant dense<0.000000e+00> : vector<64x128xf32>
    %88 = tpu.matmul %87, %86, %cst_26 {dimension_numbers = #tpu.dot_dimension_numbers<[1], [0], [0], [1], [0, 0, 1, 1], [], []>} : vector<64x6xbf16>, vector<6x128xbf16>, vector<64x128xf32> -> vector<64x128xf32>
    %c0_27 = arith.constant 0 : index
    %c0_28 = arith.constant 0 : index
    %89 = vector.load %arg4[%c0_27, %c0_28] : memref<64x1xf32, #tpu.memory_space<vmem>>, vector<64x1xf32>
    %90 = vector.broadcast %89 : vector<64x1xf32> to vector<64x128xf32>
    %91 = arith.addf %88, %90 : vector<64x128xf32>
    %cst_29 = arith.constant 0.000000e+00 : f32
    %92 = vector.broadcast %cst_29 : f32 to vector<64x128xf32>
    %93 = arith.maximumf %91, %92 : vector<64x128xf32>
    %94 = arith.truncf %93 : vector<64x128xf32> to vector<64x128xbf16>
    %c0_30 = arith.constant 0 : index
    %c0_31 = arith.constant 0 : index
    %95 = vector.load %arg5[%c0_30, %c0_31] : memref<64x64xbf16, #tpu.memory_space<vmem>>, vector<64x64xbf16>
    %cst_32 = arith.constant dense<0.000000e+00> : vector<64x128xf32>
    %96 = tpu.matmul %95, %94, %cst_32 {dimension_numbers = #tpu.dot_dimension_numbers<[1], [0], [0], [1], [0, 0, 1, 1], [], []>} : vector<64x64xbf16>, vector<64x128xbf16>, vector<64x128xf32> -> vector<64x128xf32>
    %c0_33 = arith.constant 0 : index
    %c0_34 = arith.constant 0 : index
    %97 = vector.load %arg6[%c0_33, %c0_34] : memref<64x1xf32, #tpu.memory_space<vmem>>, vector<64x1xf32>
    %98 = vector.broadcast %97 : vector<64x1xf32> to vector<64x128xf32>
    %99 = arith.addf %96, %98 : vector<64x128xf32>
    %cst_35 = arith.constant 0.000000e+00 : f32
    %100 = vector.broadcast %cst_35 : f32 to vector<64x128xf32>
    %101 = arith.maximumf %99, %100 : vector<64x128xf32>
    %102 = arith.truncf %101 : vector<64x128xf32> to vector<64x128xbf16>
    %c0_36 = arith.constant 0 : index
    %c0_37 = arith.constant 0 : index
    %103 = vector.load %arg7[%c0_36, %c0_37] : memref<64x64xbf16, #tpu.memory_space<vmem>>, vector<64x64xbf16>
    %cst_38 = arith.constant dense<0.000000e+00> : vector<64x128xf32>
    %104 = tpu.matmul %103, %102, %cst_38 {dimension_numbers = #tpu.dot_dimension_numbers<[1], [0], [0], [1], [0, 0, 1, 1], [], []>} : vector<64x64xbf16>, vector<64x128xbf16>, vector<64x128xf32> -> vector<64x128xf32>
    %c0_39 = arith.constant 0 : index
    %c0_40 = arith.constant 0 : index
    %105 = vector.load %arg8[%c0_39, %c0_40] : memref<64x1xf32, #tpu.memory_space<vmem>>, vector<64x1xf32>
    %106 = vector.broadcast %105 : vector<64x1xf32> to vector<64x128xf32>
    %107 = arith.addf %104, %106 : vector<64x128xf32>
    %cst_41 = arith.constant 0.000000e+00 : f32
    %108 = vector.broadcast %cst_41 : f32 to vector<64x128xf32>
    %109 = arith.maximumf %107, %108 : vector<64x128xf32>
    %110 = arith.truncf %109 : vector<64x128xf32> to vector<64x128xbf16>
    %c0_42 = arith.constant 0 : index
    %c0_43 = arith.constant 0 : index
    %111 = vector.load %arg9[%c0_42, %c0_43] : memref<3x64xbf16, #tpu.memory_space<vmem>>, vector<3x64xbf16>
    %cst_44 = arith.constant dense<0.000000e+00> : vector<3x128xf32>
    %112 = tpu.matmul %111, %110, %cst_44 {dimension_numbers = #tpu.dot_dimension_numbers<[1], [0], [0], [1], [0, 0, 1, 1], [], []>} : vector<3x64xbf16>, vector<64x128xbf16>, vector<3x128xf32> -> vector<3x128xf32>
    %c0_45 = arith.constant 0 : index
    %c0_46 = arith.constant 0 : index
    %113 = vector.load %arg10[%c0_45, %c0_46] : memref<3x1xf32, #tpu.memory_space<vmem>>, vector<3x1xf32>
    %114 = vector.broadcast %113 : vector<3x1xf32> to vector<3x128xf32>
    %115 = arith.addf %112, %114 : vector<3x128xf32>
    %c0_47 = arith.constant 0 : index
    %c0_48 = arith.constant 0 : index
    %116 = vector.load %arg11[%c0_47, %c0_48] : memref<6x128xf32, #tpu.memory_space<vmem>>, vector<3x128xf32>
    tpu.vector_store %arg11[%c0_47, %c0_48], %3 {strides = array<i32>} : memref<6x128xf32, #tpu.memory_space<vmem>>, vector<3x128xf32>,
    %117 = tpu.concatenate %76, %79, %85 in 0 : vector<1x128xf32>, vector<1x128xf32>, vector<1x128xf32> -> vector<3x128xf32>
    %118 = arith.addf %117, %115 : vector<3x128xf32>
    %c3 = arith.constant 3 : index
    %c0_49 = arith.constant 0 : index
    %119 = vector.load %arg11[%c3, %c0_49] : memref<6x128xf32, #tpu.memory_space<vmem>>, vector<3x128xf32>
    tpu.vector_store %arg11[%c3, %c0_49], %118 {strides = array<i32>} : memref<6x128xf32, #tpu.memory_space<vmem>>, vector<3x128xf32>,
    return
  }
  func.func @transform_0(%arg0: i32) -> (i32, i32) {
    %c0_i32 = arith.constant 0 : i32
    %c0_i32_0 = arith.constant 0 : i32
    return %c0_i32, %arg0 : i32, i32
  }
  func.func @transform_1(%arg0: i32) -> (i32, i32) {
    %c0_i32 = arith.constant 0 : i32
    %c0_i32_0 = arith.constant 0 : i32
    return %c0_i32, %arg0 : i32, i32
  }
  func.func @transform_2(%arg0: i32) -> (i32, i32) {
    %c0_i32 = arith.constant 0 : i32
    %c0_i32_0 = arith.constant 0 : i32
    %c0_i32_1 = arith.constant 0 : i32
    return %c0_i32, %c0_i32_0 : i32, i32
  }
  func.func @transform_3(%arg0: i32) -> (i32, i32) {
    %c0_i32 = arith.constant 0 : i32
    %c0_i32_0 = arith.constant 0 : i32
    %c0_i32_1 = arith.constant 0 : i32
    return %c0_i32, %c0_i32_0 : i32, i32
  }
  func.func @transform_4(%arg0: i32) -> (i32, i32) {
    %c0_i32 = arith.constant 0 : i32
    %c0_i32_0 = arith.constant 0 : i32
    %c0_i32_1 = arith.constant 0 : i32
    return %c0_i32, %c0_i32_0 : i32, i32
  }
  func.func @transform_5(%arg0: i32) -> (i32, i32) {
    %c0_i32 = arith.constant 0 : i32
    %c0_i32_0 = arith.constant 0 : i32
    %c0_i32_1 = arith.constant 0 : i32
    return %c0_i32, %c0_i32_0 : i32, i32
  }
  func.func @transform_6(%arg0: i32) -> (i32, i32) {
    %c0_i32 = arith.constant 0 : i32
    %c0_i32_0 = arith.constant 0 : i32
    %c0_i32_1 = arith.constant 0 : i32
    return %c0_i32, %c0_i32_0 : i32, i32
  }
  func.func @transform_7(%arg0: i32) -> (i32, i32) {
    %c0_i32 = arith.constant 0 : i32
    %c0_i32_0 = arith.constant 0 : i32
    %c0_i32_1 = arith.constant 0 : i32
    return %c0_i32, %c0_i32_0 : i32, i32
  }
  func.func @transform_8(%arg0: i32) -> (i32, i32) {
    %c0_i32 = arith.constant 0 : i32
    %c0_i32_0 = arith.constant 0 : i32
    %c0_i32_1 = arith.constant 0 : i32
    return %c0_i32, %c0_i32_0 : i32, i32
  }
  func.func @transform_9(%arg0: i32) -> (i32, i32) {
    %c0_i32 = arith.constant 0 : i32
    %c0_i32_0 = arith.constant 0 : i32
    %c0_i32_1 = arith.constant 0 : i32
    return %c0_i32, %c0_i32_0 : i32, i32
  }
  func.func @transform_10(%arg0: i32) -> (i32, i32) {
    %c0_i32 = arith.constant 0 : i32
    %c0_i32_0 = arith.constant 0 : i32
    return %c0_i32, %arg0 : i32, i32
  }
}

</mosaic_0001>

<llo_original>
// kernel: hybrid_dynamics_forward.1
$region0: #{hybrid_dynamics_forward.1}
  #allocation0 [shape = 'u32[]', space=smem, size = 0x4, offset = 0x4, fixed_abs, tag = 'smem constant byte address 0x4 - core index']
  #allocation1 [shape = 'u32[72,128]{1,0:T(1,128)}', space=vmem, size = 0x9000, scoped, tag = 'internal scratch']
  %s0 = inlined_call_operand.vmem [shape: f32[6,128], index: 0, kind: input, shape index: {}]
  %s1 = inlined_call_operand.vmem [shape: bf16[6,128], index: 1, kind: input, shape index: {}]
  %s2 = inlined_call_operand.vmem [shape: bf16[64,6], index: 2, kind: input, shape index: {}]
  %s3 = inlined_call_operand.vmem [shape: f32[64,1], index: 3, kind: input, shape index: {}]
  %s4 = inlined_call_operand.vmem [shape: bf16[64,64], index: 4, kind: input, shape index: {}]
  %s5 = inlined_call_operand.vmem [shape: f32[64,1], index: 5, kind: input, shape index: {}]
  %s6 = inlined_call_operand.vmem [shape: bf16[64,64], index: 6, kind: input, shape index: {}]
  %s7 = inlined_call_operand.vmem [shape: f32[64,1], index: 7, kind: input, shape index: {}]
  %s8 = inlined_call_operand.vmem [shape: bf16[3,64], index: 8, kind: input, shape index: {}]
  %s9 = inlined_call_operand.vmem [shape: f32[3,1], index: 9, kind: input, shape index: {}]
  %s10 = inlined_call_operand.vmem [shape: f32[6,128], index: 10, kind: output, shape index: {}]
  %s11 = sld [smem:[#allocation0]]
  $region50: #{hybrid_dynamics_forward.1} parent=0
    _
  %s13 = ssub.s32 1, %s11
  %s14 = scalar_select 0, %s13, %s11
  // Predicated region
  $region2: #{hybrid_dynamics_forward.1} parent=0 // pred_check
    _
  $region3: #{hybrid_dynamics_forward.1} parent=0 // pred_check_branch
    %16 = sbr.rel (0) target = $region5
  $region4: #{hybrid_dynamics_forward.1} parent=0 // pred_region
    _
  $region5: #{hybrid_dynamics_forward.1} parent=0 // pred_fallthru
    _
  // Predicated region
  $region6: #{hybrid_dynamics_forward.1} parent=0 // pred_check
    _
  $region7: #{hybrid_dynamics_forward.1} parent=0 // pred_check_branch
    %18 = sbr.rel (0) target = $region9
  $region8: #{hybrid_dynamics_forward.1} parent=0 // pred_region
    _
  $region9: #{hybrid_dynamics_forward.1} parent=0 // pred_fallthru
    _
  // Predicated region
  $region10: #{hybrid_dynamics_forward.1} parent=0 // pred_check
    _
  $region11: #{hybrid_dynamics_forward.1} parent=0 // pred_check_branch
    %20 = sbr.rel (0) target = $region13
  $region12: #{hybrid_dynamics_forward.1} parent=0 // pred_region
    _
  $region13: #{hybrid_dynamics_forward.1} parent=0 // pred_fallthru
    _
  // Predicated region
  $region14: #{hybrid_dynamics_forward.1} parent=0 // pred_check
    _
  $region15: #{hybrid_dynamics_forward.1} parent=0 // pred_check_branch
    %22 = sbr.rel (0) target = $region17
  $region16: #{hybrid_dynamics_forward.1} parent=0 // pred_region
    _
  $region17: #{hybrid_dynamics_forward.1} parent=0 // pred_fallthru
    _
  // Predicated region
  $region18: #{hybrid_dynamics_forward.1} parent=0 // pred_check
    _
  $region19: #{hybrid_dynamics_forward.1} parent=0 // pred_check_branch
    %24 = sbr.rel (0) target = $region21
  $region20: #{hybrid_dynamics_forward.1} parent=0 // pred_region
    _
  $region21: #{hybrid_dynamics_forward.1} parent=0 // pred_fallthru
    _
  // Predicated region
  $region22: #{hybrid_dynamics_forward.1} parent=0 // pred_check
    _
  $region23: #{hybrid_dynamics_forward.1} parent=0 // pred_check_branch
    %26 = sbr.rel (0) target = $region25
  $region24: #{hybrid_dynamics_forward.1} parent=0 // pred_region
    _
  $region25: #{hybrid_dynamics_forward.1} parent=0 // pred_fallthru
    _
  // Predicated region
  $region26: #{hybrid_dynamics_forward.1} parent=0 // pred_check
    _
  $region27: #{hybrid_dynamics_forward.1} parent=0 // pred_check_branch
    %28 = sbr.rel (0) target = $region29
  $region28: #{hybrid_dynamics_forward.1} parent=0 // pred_region
    _
  $region29: #{hybrid_dynamics_forward.1} parent=0 // pred_fallthru
    _
  // Predicated region
  $region30: #{hybrid_dynamics_forward.1} parent=0 // pred_check
    _
  $region31: #{hybrid_dynamics_forward.1} parent=0 // pred_check_branch
    %30 = sbr.rel (0) target = $region33
  $region32: #{hybrid_dynamics_forward.1} parent=0 // pred_region
    _
  $region33: #{hybrid_dynamics_forward.1} parent=0 // pred_fallthru
    _
  // Predicated region
  $region34: #{hybrid_dynamics_forward.1} parent=0 // pred_check
    _
  $region35: #{hybrid_dynamics_forward.1} parent=0 // pred_check_branch
    %32 = sbr.rel (0) target = $region37
  $region36: #{hybrid_dynamics_forward.1} parent=0 // pred_region
    _
  $region37: #{hybrid_dynamics_forward.1} parent=0 // pred_fallthru
    _
  // Predicated region
  $region38: #{hybrid_dynamics_forward.1} parent=0 // pred_check
    _
  $region39: #{hybrid_dynamics_forward.1} parent=0 // pred_check_branch
    %34 = sbr.rel (0) target = $region41
  $region40: #{hybrid_dynamics_forward.1} parent=0 // pred_region
    _
  $region41: #{hybrid_dynamics_forward.1} parent=0 // pred_fallthru
    _
  %v36 = vld [vmem:[%s0] sm:$0x3f]
  %v38 = vrot.slane %v36, 3
  %v40 = vadd.f32 %v36, %v38
  %v41 = vmul.f32 %v40, 1.327e-10
  %v42 = vsub.f32 %v41, 7.894e-08
  %v43 = vmul.f32 %v42, %v40
  %v44 = vadd.f32 %v43, 1.314e-05
  %v45 = vmul.f32 %v44, %v40
  %v46 = vsub.f32 %v45, 0.001259
  %v47 = vmul.f32 %v46, %v40
  %v48 = vsub.f32 %v47, 0.1502
  %v49 = vmul.f32 %v48, %v40
  %v50 = vadd.f32 %v49, 80.92
  %v52 = vrot.slane %v50, 1
  %v54 = vsub.f32 %v50, %v52
  %v55 = vand.u32 2147483647, %v54
  %vm56 = vcmp.lt.f32.partialorder %v55, 1e-06
  %v57 = vsel %vm56, 1, 0
  %v58 = vrot.slane %v57, 1
  %vm59 = vcmp.ne.s32.totalorder %v58, 0
  %vm60 = vmand %vm56, %vm59
  %v61 = vadd.f32 %v50, %v52
  %v62 = vrot.slane %v50, 2
  %v64 = vadd.f32 %v61, %v62
  %v65 = vmul.f32 %v64, 0.33333334
  %v66 = vmul.f32 %v54, 0.57735026
  %v67 = vmul.f32 %v50, 2.0
  %v69 = vrot.slane %v67, 7
  %v71 = vsub.f32 %v61, %v69
  %v72 = vmul.f32 %v71, 0.33333334
  %v73 = vmul.f32 %v66, %v66
  %v74 = vmul.f32 %v72, %v72
  %v75 = vadd.f32 %v73, %v74
  %v76 = vrsqrt.pop %v75
  %v77 = vmul.f32 %v76, %v75
  %v78 = vmul.f32 %v77, %v76
  %v79 = vmul.f32 0.5, %v78
  %v80 = vsub.f32 1.5, %v79
  %v81 = vmul.f32 %v76, %v80
  %v82 = vmul.f32 %v75, %v81
  %vm83 = vcmp.eq.f32.partialorder %v75, inf
  %v84 = vsel %vm83, %v75, %v82
  %vm85 = vcmp.eq.f32.partialorder %v75, 0.0
  %v86 = vand.u32 %v75, 2147483648
  %v87 = vsel %vm85, %v86, %v84
  %v89 = vrot.slane %v87, 1
  %v91 = vsel %vm60, 1.0, %v89
  %v92 = vrcp.pop %v91
  %v93 = vmul.f32 %v91, 0.035714287
  %v94 = vmul.f32 %v92, 28.0
  %v96 = vrot.slane %v92, 7
  %v98 = vmul.f32 %v66, %v96
  %v99 = vmul.f32 %v72, %v96
  %v100 = vand.u32 2147483647, %v65
  %v101 = vand.u32 2147483647, %v93
  %vm102 = vcmp.le.f32.partialorder %v101, 0.7853982
  %vm103 = vcmp.lt.s32.totalorder %v93, 0
  %v104 = vand.u32 %v93, 2139095040
  %v105 = vshrl.u32 %v104, 23
  %v106 = vsub.s32 %v105, 127
  %v107 = vand.u32 2147483647, %v93
  %v108 = vand.u32 %v107, 8388607
  %v109 = vor.u32 %v108, 8388608
  %v110 = vsub.s32 0, %v109
  %v111 = vadd.s32 %v106, 1
  %vm112 = vcmp.gt.s32.totalorder %v111, 0
  %v113 = vsel %vm112, %v111, 0
  %v114 = vshrl.u32 %v113, 5
  %v115 = vand.u32 %v113, 31
  %v116 = vsub.s32 32, %v115
  %v117 = vshrl.u32 683565275, %v116
  %v118 = vshll.u32 683565275, %v115
  %v119 = vshrl.u32 2475754826, %v116
  %v120 = vor.u32 %v118, %v119
  %v121 = vshll.u32 2475754826, %v115
  %v122 = vshrl.u32 2131351028, %v116
  %v123 = vor.u32 %v121, %v122
  %v124 = vshll.u32 2131351028, %v115
  %v125 = vshrl.u32 2102212464, %v116
  %v126 = vor.u32 %v124, %v125
  %v127 = vshll.u32 2102212464, %v115
  %v128 = vshrl.u32 920167782, %v116
  %v129 = vor.u32 %v127, %v128
  %v130 = vshll.u32 920167782, %v115
  %v131 = vshrl.u32 1326507024, %v116
  %v132 = vor.u32 %v130, %v131
  %vm133 = vcmp.lt.s32.totalorder %v114, 1
  %vm134 = vcmp.lt.s32.totalorder %v114, 2
  %vm135 = vcmp.lt.s32.totalorder %v114, 3
  %vm136 = vcmp.lt.s32.totalorder %v114, 4
  %v137 = vsel %vm133, %v117, %v120
  %v138 = vsel %vm136, %v126, 2102212464
  %v139 = vsel %vm135, %v123, %v138
  %v140 = vsel %vm134, %v137, %v139
  %v141 = vsel %vm133, %v120, %v123
  %v142 = vsel %vm136, %v129, 920167782
  %v143 = vsel %vm135, %v126, %v142
  %v144 = vsel %vm134, %v141, %v143
  %v145 = vsel %vm133, %v123, %v126
  %v146 = vsel %vm136, %v132, 1326507024
  %v147 = vsel %vm135, %v129, %v146
  %v148 = vsel %vm134, %v145, %v147
  %v149 = vshll.u32 %v109, 8
  %v150 = vand.u32 %v149, 65535
  %v151 = vshrl.u32 %v149, 16
  %v152 = vand.u32 %v148, 65535
  %v153 = vshrl.u32 %v148, 16
  %v154 = vmul.u32 %v150, %v152
  %v155 = vmul.u32 %v150, %v153
  %v156 = vmul.u32 %v151, %v152
  %v157 = vmul.u32 %v151, %v153
  %v158 = vshll.u32 %v155, 16
  %v159 = vshrl.u32 %v155, 16
  %v160 = vshll.u32 %v156, 16
  %v161 = vshrl.u32 %v156, 16
  %vm162 = vc.u32 %v154, %v158
  %v163 = vsel %vm162, 1, 0
  %v164 = vadd.s32 %v154, %v158
  %v165 = vadd.s32 %v157, %v163
  %vm166 = vc.u32 %v164, %v160
  %v167 = vsel %vm166, 1, 0
  %v168 = vadd.s32 %v164, %v160
  %v169 = vadd.s32 %v165, %v167
  %v170 = vadd.s32 %v169, %v159
  %v171 = vadd.s32 %v170, %v161
  %v172 = vand.u32 %v149, 65535
  %v173 = vshrl.u32 %v149, 16
  %v174 = vand.u32 %v144, 65535
  %v175 = vshrl.u32 %v144, 16
  %v176 = vmul.u32 %v172, %v174
  %v177 = vmul.u32 %v172, %v175
  %v178 = vmul.u32 %v173, %v174
  %v179 = vmul.u32 %v173, %v175
  %v180 = vshll.u32 %v177, 16
  %v181 = vshrl.u32 %v177, 16
  %v182 = vshll.u32 %v178, 16
  %v183 = vshrl.u32 %v178, 16
  %vm184 = vc.u32 %v176, %v180
  %v185 = vsel %vm184, 1, 0
  %v186 = vadd.s32 %v176, %v180
  %v187 = vadd.s32 %v179, %v185
  %vm188 = vc.u32 %v186, %v182
  %v189 = vsel %vm188, 1, 0
  %v190 = vadd.s32 %v186, %v182
  %v191 = vadd.s32 %v187, %v189
  %v192 = vadd.s32 %v191, %v181
  %v193 = vadd.s32 %v192, %v183
  %v194 = vmul.u32 %v149, %v140
  %v195 = vadd.s32 %v171, %v190
  %vm196 = vc.u32 %v171, %v190
  %v197 = vadd.s32 %v193, 1
  %v198 = vsel %vm196, %v197, %v193
  %v199 = vadd.s32 %v194, %v198
  %v200 = vadd.s32 %v199, 536870912
  %v201 = vshrl.u32 %v200, 30
  %v202 = vshll.u32 %v201, 30
  %v203 = vsub.s32 %v199, %v202
  %vm204 = vcmp.lt.s32.totalorder %v203, 0
  %v205 = vsub.s32 0, %v203
  %v206 = vsel %vm204, %v205, %v203
  %v207 = vclz %v206
  %v208 = vsub.s32 %v207, 2
  %vm209 = vcmp.gt.s32.totalorder 0, %v208
  %v210 = vsel %vm209, 0, %v208
  %v211 = vsub.s32 32, %v210
  %v212 = vshll.u32 %v203, %v210
  %v213 = vshrl.u32 %v195, %v211
  %v214 = vor.u32 %v212, %v213
  %v215 = vsub.s32 4294967266, %v210
  %v216 = vadd.s32 %v215, 127
  %v217 = vshll.u32 %v216, 23
  %v218 = vor.u32 4788187, %v217
  %v219 = vand.u32 2147483647, %v218
  %v221 = vcvt.s32.f32 %v214
  %v222 = vmul.f32 %v221, %v219
  %v223 = vxor.u32 %v222, 2147483648
  %v224 = vsel %vm103, %v223, %v222
  %v225 = vsub.s32 4, %v201
  %v226 = vsel %vm103, %v225, %v201
  %v227 = vsel %vm102, %v93, %v224
  %v228 = vsel %vm102, 0, %v226
  %v229 = vmul.f32 %v227, %v227
  %v230 = vmul.f32 %v229, -0.001358992
  %v231 = vadd.f32 %v230, 0.041655596
  %v232 = vmul.f32 %v229, %v231
  %v233 = vadd.f32 %v232, -0.4999988
  %v234 = vmul.f32 %v229, %v233
  %v235 = vadd.f32 1.0, %v234
  %v236 = vmul.f32 %v227, %v227
  %v237 = vmul.f32 %v236, -0.00019511016
  %v238 = vadd.f32 %v237, 0.008332121
  %v239 = vmul.f32 %v236, %v238
  %v240 = vadd.f32 %v239, -0.16666654
  %v241 = vmul.f32 %v236, %v240
  %v242 = vadd.f32 %v241, 1.0
  %v243 = vmul.f32 %v242, %v227
  %vm244 = vweird.f32 %v93
  %v245 = vadd.s32 %v228, 3
  %v246 = vand.u32 %v245, 3
  %vm247 = vcmp.lt.s32.totalorder %v246, 2
  %vm248 = vcmp.eq.s32.totalorder %v246, 0
  %v249 = vxor.u32 %v243, 2147483648
  %v250 = vsel %vm248, %v235, %v249
  %vm251 = vcmp.eq.s32.totalorder %v246, 2
  %v252 = vxor.u32 %v235, 2147483648
  %v253 = vsel %vm251, %v252, %v243
  %v254 = vsel %vm247, %v250, %v253
  %v255 = vsel %vm244, nan, %v254
  %v256 = vand.u32 2147483647, %v93
  %vm257 = vcmp.le.f32.partialorder %v256, 0.7853982
  %vm258 = vcmp.lt.s32.totalorder %v93, 0
  %v259 = vand.u32 %v93, 2139095040
  %v260 = vshrl.u32 %v259, 23
  %v261 = vsub.s32 %v260, 127
  %v262 = vand.u32 2147483647, %v93
  %v263 = vand.u32 %v262, 8388607
  %v264 = vor.u32 %v263, 8388608
  %v265 = vsub.s32 0, %v264
  %v266 = vadd.s32 %v261, 1
  %vm267 = vcmp.gt.s32.totalorder %v266, 0
  %v268 = vsel %vm267, %v266, 0
  %v269 = vshrl.u32 %v268, 5
  %v270 = vand.u32 %v268, 31
  %v271 = vsub.s32 32, %v270
  %v272 = vshrl.u32 683565275, %v271
  %v273 = vshll.u32 683565275, %v270
  %v274 = vshrl.u32 2475754826, %v271
  %v275 = vor.u32 %v273, %v274
  %v276 = vshll.u32 2475754826, %v270
  %v277 = vshrl.u32 2131351028, %v271
  %v278 = vor.u32 %v276, %v277
  %v279 = vshll.u32 2131351028, %v270
  %v280 = vshrl.u32 2102212464, %v271
  %v281 = vor.u32 %v279, %v280
  %v282 = vshll.u32 2102212464, %v270
  %v283 = vshrl.u32 920167782, %v271
  %v284 = vor.u32 %v282, %v283
  %v285 = vshll.u32 920167782, %v270
  %v286 = vshrl.u32 1326507024, %v271
  %v287 = vor.u32 %v285, %v286
  %vm288 = vcmp.lt.s32.totalorder %v269, 1
  %vm289 = vcmp.lt.s32.totalorder %v269, 2
  %vm290 = vcmp.lt.s32.totalorder %v269, 3
  %vm291 = vcmp.lt.s32.totalorder %v269, 4
  %v292 = vsel %vm288, %v272, %v275
  %v293 = vsel %vm291, %v281, 2102212464
  %v294 = vsel %vm290, %v278, %v293
  %v295 = vsel %vm289, %v292, %v294
  %v296 = vsel %vm288, %v275, %v278
  %v297 = vsel %vm291, %v284, 920167782
  %v298 = vsel %vm290, %v281, %v297
  %v299 = vsel %vm289, %v296, %v298
  %v300 = vsel %vm288, %v278, %v281
  %v301 = vsel %vm291, %v287, 1326507024
  %v302 = vsel %vm290, %v284, %v301
  %v303 = vsel %vm289, %v300, %v302
  %v304 = vshll.u32 %v264, 8
  %v305 = vand.u32 %v304, 65535
  %v306 = vshrl.u32 %v304, 16
  %v307 = vand.u32 %v303, 65535
  %v308 = vshrl.u32 %v303, 16
  %v309 = vmul.u32 %v305, %v307
  %v310 = vmul.u32 %v305, %v308
  %v311 = vmul.u32 %v306, %v307
  %v312 = vmul.u32 %v306, %v308
  %v313 = vshll.u32 %v310, 16
  %v314 = vshrl.u32 %v310, 16
  %v315 = vshll.u32 %v311, 16
  %v316 = vshrl.u32 %v311, 16
  %vm317 = vc.u32 %v309, %v313
  %v318 = vsel %vm317, 1, 0
  %v319 = vadd.s32 %v309, %v313
  %v320 = vadd.s32 %v312, %v318
  %vm321 = vc.u32 %v319, %v315
  %v322 = vsel %vm321, 1, 0
  %v323 = vadd.s32 %v319, %v315
  %v324 = vadd.s32 %v320, %v322
  %v325 = vadd.s32 %v324, %v314
  %v326 = vadd.s32 %v325, %v316
  %v327 = vand.u32 %v304, 65535
  %v328 = vshrl.u32 %v304, 16
  %v329 = vand.u32 %v299, 65535
  %v330 = vshrl.u32 %v299, 16
  %v331 = vmul.u32 %v327, %v329
  %v332 = vmul.u32 %v327, %v330
  %v333 = vmul.u32 %v328, %v329
  %v334 = vmul.u32 %v328, %v330
  %v335 = vshll.u32 %v332, 16
  %v336 = vshrl.u32 %v332, 16
  %v337 = vshll.u32 %v333, 16
  %v338 = vshrl.u32 %v333, 16
  %vm339 = vc.u32 %v331, %v335
  %v340 = vsel %vm339, 1, 0
  %v341 = vadd.s32 %v331, %v335
  %v342 = vadd.s32 %v334, %v340
  %vm343 = vc.u32 %v341, %v337
  %v344 = vsel %vm343, 1, 0
  %v345 = vadd.s32 %v341, %v337
  %v346 = vadd.s32 %v342, %v344
  %v347 = vadd.s32 %v346, %v336
  %v348 = vadd.s32 %v347, %v338
  %v349 = vmul.u32 %v304, %v295
  %v350 = vadd.s32 %v326, %v345
  %vm351 = vc.u32 %v326, %v345
  %v352 = vadd.s32 %v348, 1
  %v353 = vsel %vm351, %v352, %v348
  %v354 = vadd.s32 %v349, %v353
  %v355 = vadd.s32 %v354, 536870912
  %v356 = vshrl.u32 %v355, 30
  %v357 = vshll.u32 %v356, 30
  %v358 = vsub.s32 %v354, %v357
  %vm359 = vcmp.lt.s32.totalorder %v358, 0
  %v360 = vsub.s32 0, %v358
  %v361 = vsel %vm359, %v360, %v358
  %v362 = vclz %v361
  %v363 = vsub.s32 %v362, 2
  %vm364 = vcmp.gt.s32.totalorder 0, %v363
  %v365 = vsel %vm364, 0, %v363
  %v366 = vsub.s32 32, %v365
  %v367 = vshll.u32 %v358, %v365
  %v368 = vshrl.u32 %v350, %v366
  %v369 = vor.u32 %v367, %v368
  %v370 = vsub.s32 4294967266, %v365
  %v371 = vadd.s32 %v370, 127
  %v372 = vshll.u32 %v371, 23
  %v373 = vor.u32 4788187, %v372
  %v374 = vand.u32 2147483647, %v373
  %v376 = vcvt.s32.f32 %v369
  %v377 = vmul.f32 %v376, %v374
  %v378 = vxor.u32 %v377, 2147483648
  %v379 = vsel %vm258, %v378, %v377
  %v380 = vsub.s32 4, %v356
  %v381 = vsel %vm258, %v380, %v356
  %v382 = vsel %vm257, %v93, %v379
  %v383 = vsel %vm257, 0, %v381
  %v384 = vmul.f32 %v382, %v382
  %v385 = vmul.f32 %v384, -0.001358992
  %v386 = vadd.f32 %v385, 0.041655596
  %v387 = vmul.f32 %v384, %v386
  %v388 = vadd.f32 %v387, -0.4999988
  %v389 = vmul.f32 %v384, %v388
  %v390 = vadd.f32 1.0, %v389
  %v391 = vmul.f32 %v382, %v382
  %v392 = vmul.f32 %v391, -0.00019511016
  %v393 = vadd.f32 %v392, 0.008332121
  %v394 = vmul.f32 %v391, %v393
  %v395 = vadd.f32 %v394, -0.16666654
  %v396 = vmul.f32 %v391, %v395
  %v397 = vadd.f32 %v396, 1.0
  %v398 = vmul.f32 %v397, %v382
  %vm399 = vweird.f32 %v93
  %v400 = vand.u32 %v383, 3
  %vm401 = vcmp.lt.s32.totalorder %v400, 2
  %vm402 = vcmp.eq.s32.totalorder %v400, 0
  %v403 = vxor.u32 %v398, 2147483648
  %v404 = vsel %vm402, %v390, %v403
  %vm405 = vcmp.eq.s32.totalorder %v400, 2
  %v406 = vxor.u32 %v390, 2147483648
  %v407 = vsel %vm405, %v406, %v398
  %v408 = vsel %vm401, %v404, %v407
  %v409 = vsel %vm399, nan, %v408
  %v410 = vmul.f32 %v93, 0.5
  %v411 = vand.u32 2147483647, %v410
  %vm412 = vcmp.le.f32.partialorder %v411, 0.7853982
  %vm413 = vcmp.lt.s32.totalorder %v410, 0
  %v414 = vand.u32 %v410, 2139095040
  %v415 = vshrl.u32 %v414, 23
  %v416 = vsub.s32 %v415, 127
  %v417 = vand.u32 2147483647, %v410
  %v418 = vand.u32 %v417, 8388607
  %v419 = vor.u32 %v418, 8388608
  %v420 = vsub.s32 0, %v419
  %v421 = vadd.s32 %v416, 1
  %vm422 = vcmp.gt.s32.totalorder %v421, 0
  %v423 = vsel %vm422, %v421, 0
  %v424 = vshrl.u32 %v423, 5
  %v425 = vand.u32 %v423, 31
  %v426 = vsub.s32 32, %v425
  %v427 = vshrl.u32 683565275, %v426
  %v428 = vshll.u32 683565275, %v425
  %v429 = vshrl.u32 2475754826, %v426
  %v430 = vor.u32 %v428, %v429
  %v431 = vshll.u32 2475754826, %v425
  %v432 = vshrl.u32 2131351028, %v426
  %v433 = vor.u32 %v431, %v432
  %v434 = vshll.u32 2131351028, %v425
  %v435 = vshrl.u32 2102212464, %v426
  %v436 = vor.u32 %v434, %v435
  %v437 = vshll.u32 2102212464, %v425
  %v438 = vshrl.u32 920167782, %v426
  %v439 = vor.u32 %v437, %v438
  %v440 = vshll.u32 920167782, %v425
  %v441 = vshrl.u32 1326507024, %v426
  %v442 = vor.u32 %v440, %v441
  %vm443 = vcmp.lt.s32.totalorder %v424, 1
  %vm444 = vcmp.lt.s32.totalorder %v424, 2
  %vm445 = vcmp.lt.s32.totalorder %v424, 3
  %vm446 = vcmp.lt.s32.totalorder %v424, 4
  %v447 = vsel %vm443, %v427, %v430
  %v448 = vsel %vm446, %v436, 2102212464
  %v449 = vsel %vm445, %v433, %v448
  %v450 = vsel %vm444, %v447, %v449
  %v451 = vsel %vm443, %v430, %v433
  %v452 = vsel %vm446, %v439, 920167782
  %v453 = vsel %vm445, %v436, %v452
  %v454 = vsel %vm444, %v451, %v453
  %v455 = vsel %vm443, %v433, %v436
  %v456 = vsel %vm446, %v442, 1326507024
  %v457 = vsel %vm445, %v439, %v456
  %v458 = vsel %vm444, %v455, %v457
  %v459 = vshll.u32 %v419, 8
  %v460 = vand.u32 %v459, 65535
  %v461 = vshrl.u32 %v459, 16
  %v462 = vand.u32 %v458, 65535
  %v463 = vshrl.u32 %v458, 16
  %v464 = vmul.u32 %v460, %v462
  %v465 = vmul.u32 %v460, %v463
  %v466 = vmul.u32 %v461, %v462
  %v467 = vmul.u32 %v461, %v463
  %v468 = vshll.u32 %v465, 16
  %v469 = vshrl.u32 %v465, 16
  %v470 = vshll.u32 %v466, 16
  %v471 = vshrl.u32 %v466, 16
  %vm472 = vc.u32 %v464, %v468
  %v473 = vsel %vm472, 1, 0
  %v474 = vadd.s32 %v464, %v468
  %v475 = vadd.s32 %v467, %v473
  %vm476 = vc.u32 %v474, %v470
  %v477 = vsel %vm476, 1, 0
  %v478 = vadd.s32 %v474, %v470
  %v479 = vadd.s32 %v475, %v477
  %v480 = vadd.s32 %v479, %v469
  %v481 = vadd.s32 %v480, %v471
  %v482 = vand.u32 %v459, 65535
  %v483 = vshrl.u32 %v459, 16
  %v484 = vand.u32 %v454, 65535
  %v485 = vshrl.u32 %v454, 16
  %v486 = vmul.u32 %v482, %v484
  %v487 = vmul.u32 %v482, %v485
  %v488 = vmul.u32 %v483, %v484
  %v489 = vmul.u32 %v483, %v485
  %v490 = vshll.u32 %v487, 16
  %v491 = vshrl.u32 %v487, 16
  %v492 = vshll.u32 %v488, 16
  %v493 = vshrl.u32 %v488, 16
  %vm494 = vc.u32 %v486, %v490
  %v495 = vsel %vm494, 1, 0
  %v496 = vadd.s32 %v486, %v490
  %v497 = vadd.s32 %v489, %v495
  %vm498 = vc.u32 %v496, %v492
  %v499 = vsel %vm498, 1, 0
  %v500 = vadd.s32 %v496, %v492
  %v501 = vadd.s32 %v497, %v499
  %v502 = vadd.s32 %v501, %v491
  %v503 = vadd.s32 %v502, %v493
  %v504 = vmul.u32 %v459, %v450
  %v505 = vadd.s32 %v481, %v500
  %vm506 = vc.u32 %v481, %v500
  %v507 = vadd.s32 %v503, 1
  %v508 = vsel %vm506, %v507, %v503
  %v509 = vadd.s32 %v504, %v508
  %v510 = vadd.s32 %v509, 536870912
  %v511 = vshrl.u32 %v510, 30
  %v512 = vshll.u32 %v511, 30
  %v513 = vsub.s32 %v509, %v512
  %vm514 = vcmp.lt.s32.totalorder %v513, 0
  %v515 = vsub.s32 0, %v513
  %v516 = vsel %vm514, %v515, %v513
  %v517 = vclz %v516
  %v518 = vsub.s32 %v517, 2
  %vm519 = vcmp.gt.s32.totalorder 0, %v518
  %v520 = vsel %vm519, 0, %v518
  %v521 = vsub.s32 32, %v520
  %v522 = vshll.u32 %v513, %v520
  %v523 = vshrl.u32 %v505, %v521
  %v524 = vor.u32 %v522, %v523
  %v525 = vsub.s32 4294967266, %v520
  %v526 = vadd.s32 %v525, 127
  %v527 = vshll.u32 %v526, 23
  %v528 = vor.u32 4788187, %v527
  %v529 = vand.u32 2147483647, %v528
  %v531 = vcvt.s32.f32 %v524
  %v532 = vmul.f32 %v531, %v529
  %v533 = vxor.u32 %v532, 2147483648
  %v534 = vsel %vm413, %v533, %v532
  %v535 = vsub.s32 4, %v511
  %v536 = vsel %vm413, %v535, %v511
  %v537 = vsel %vm412, %v410, %v534
  %v538 = vsel %vm412, 0, %v536
  %v539 = vmul.f32 %v537, %v537
  %v540 = vmul.f32 %v539, -0.001358992
  %v541 = vadd.f32 %v540, 0.041655596
  %v542 = vmul.f32 %v539, %v541
  %v543 = vadd.f32 %v542, -0.4999988
  %v544 = vmul.f32 %v539, %v543
  %v545 = vadd.f32 1.0, %v544
  %v546 = vmul.f32 %v537, %v537
  %v547 = vmul.f32 %v546, -0.00019511016
  %v548 = vadd.f32 %v547, 0.008332121
  %v549 = vmul.f32 %v546, %v548
  %v550 = vadd.f32 %v549, -0.16666654
  %v551 = vmul.f32 %v546, %v550
  %v552 = vadd.f32 %v551, 1.0
  %v553 = vmul.f32 %v552, %v537
  %vm554 = vweird.f32 %v410
  %v555 = vadd.s32 %v538, 3
  %v556 = vand.u32 %v555, 3
  %vm557 = vcmp.lt.s32.totalorder %v556, 2
  %vm558 = vcmp.eq.s32.totalorder %v556, 0
  %v559 = vxor.u32 %v553, 2147483648
  %v560 = vsel %vm558, %v545, %v559
  %vm561 = vcmp.eq.s32.totalorder %v556, 2
  %v562 = vxor.u32 %v545, 2147483648
  %v563 = vsel %vm561, %v562, %v553
  %v564 = vsel %vm557, %v560, %v563
  %v565 = vsel %vm554, nan, %v564
  %v566 = vmul.f32 %v565, 2.0
  %v567 = vmul.f32 %v566, %v565
  %v568 = vmul.f32 %v100, %v567
  %v569 = vmul.f32 %v568, %v94
  %v570 = vmul.f32 %v100, %v255
  %v571 = vmul.f32 %v570, %v94
  %v572 = vmul.f32 %v255, 50.0
  %v573 = vadd.f32 %v569, %v572
  %v575 = vrot.slane %v98, 1
  %v577 = vmul.f32 %v573, %v575
  %v578 = vsel %vm60, 0.0, %v577
  %v580 = vrot.slane %v99, 1
  %v582 = vmul.f32 %v573, %v580
  %v583 = vsel %vm60, 0.0, %v582
  %v584 = vadd.f32 %v50, 50.0
  %v585 = vmul.f32 %v409, 50.0
  %v586 = vadd.f32 %v571, %v585
  %v587 = vsel %vm60, %v584, %v586
  %v588 = vld [vmem:[%s1] sm:$0x7]
  %v589 = vld [vmem:[%s2] sm:$0xf]
  %v590 = vld [vmem:[%s2 + $0x4] sm:$0xf]
  %v591 = vld [vmem:[%s2 + $0x8] sm:$0xf]
  %v592 = vld [vmem:[%s2 + $0xc] sm:$0xf]
  %v593 = vld [vmem:[%s2 + $0x10] sm:$0xf]
  %v594 = vld [vmem:[%s2 + $0x14] sm:$0xf]
  %v595 = vld [vmem:[%s2 + $0x18] sm:$0xf]
  %v596 = vld [vmem:[%s2 + $0x1c] sm:$0xf]
  %v597 = vld [vmem:[%s3] sm:$0xff]
  %v598 = vld [vmem:[%s3 + $0x8] sm:$0xff]
  %v599 = vld [vmem:[%s3 + $0x10] sm:$0xff]
  %v600 = vld [vmem:[%s3 + $0x18] sm:$0xff]
  %v601 = vld [vmem:[%s3 + $0x20] sm:$0xff]
  %v602 = vld [vmem:[%s3 + $0x28] sm:$0xff]
  %v603 = vld [vmem:[%s3 + $0x30] sm:$0xff]
  %v604 = vld [vmem:[%s3 + $0x38] sm:$0xff]
  %606 = vset.pattern.permute.xlu0 0
  %607 = vperm.xlu0 %606, %v597
  %v608 = vpop.permute.xlu0 %607
  %611 = vset.pattern.permute.xlu0 0
  %612 = vperm.xlu0 %611, %v598
  %v613 = vpop.permute.xlu0 %612
  %616 = vset.pattern.permute.xlu0 0
  %617 = vperm.xlu0 %616, %v599
  %v618 = vpop.permute.xlu0 %617
  %621 = vset.pattern.permute.xlu0 0
  %622 = vperm.xlu0 %621, %v600
  %v623 = vpop.permute.xlu0 %622
  %626 = vset.pattern.permute.xlu0 0
  %627 = vperm.xlu0 %626, %v601
  %v628 = vpop.permute.xlu0 %627
  %631 = vset.pattern.permute.xlu0 0
  %632 = vperm.xlu0 %631, %v602
  %v633 = vpop.permute.xlu0 %632
  %636 = vset.pattern.permute.xlu0 0
  %637 = vperm.xlu0 %636, %v603
  %v638 = vpop.permute.xlu0 %637
  %641 = vset.pattern.permute.xlu0 0
  %642 = vperm.xlu0 %641, %v604
  %v643 = vpop.permute.xlu0 %642
  %v653 = vunpack.c.l.b16 %v589
  %v654 = vunpack.c.l.b16 %v590
  %v655 = vunpack.c.l.b16 %v591
  %v656 = vunpack.c.l.b16 %v592
  %v657 = vunpack.c.l.b16 %v593
  %v658 = vunpack.c.l.b16 %v594
  %v659 = vunpack.c.l.b16 %v595
  %v660 = vunpack.c.l.b16 %v596
  %v661 = vpack.c.b16 %v654, %v653
  %v662 = vpack.c.b16 %v656, %v655
  %v663 = vpack.c.b16 %v658, %v657
  %v664 = vpack.c.b16 %v660, %v659
  %vm665 = vcmask 48128
  %v667 = vsel %vm665, %v661, 0
  %v670 = vsel %vm665, %v662, 0
  %v673 = vsel %vm665, %v663, 0
  %v676 = vsel %vm665, %v664, 0
  %vm678 = vcmask 1042432
  %v680 = vsel %vm678, %v588, 0
  %682 = vmatpush.bf16.msra.mxu0 0
  %683 = vmatpush.bf16.msra.mxu0 0
  %684 = vmatpush.bf16.msra.mxu0 0
  %685 = vmatpush.bf16.msra.mxu0 0
  %686 = vmatpush.bf16.msra.mxu0 0
  %687 = vmatpush.bf16.msra.mxu0 0
  %688 = vmatpush.bf16.msra.mxu0 0
  %689 = vmatpush.bf16.msra.mxu0 %v680
  %690 = vmatmul.bf16.gmra.mxu0 %v667
  %v691 = vpop.f32.mrf.mxu0
  %v692 = vadd.f32 %v608, %v691
  %v693 = vpop.f32.mrf.mxu0
  %v694 = vadd.f32 %v613, %v693
  %695 = vmatmul.bf16.gmra.mxu0 %v670
  %v696 = vpop.f32.mrf.mxu0
  %v697 = vadd.f32 %v618, %v696
  %v698 = vpop.f32.mrf.mxu0
  %v699 = vadd.f32 %v623, %v698
  %700 = vmatmul.bf16.gmra.mxu0 %v673
  %v701 = vpop.f32.mrf.mxu0
  %v702 = vadd.f32 %v628, %v701
  %v703 = vpop.f32.mrf.mxu0
  %v704 = vadd.f32 %v633, %v703
  %705 = vmatmul.bf16.gmra.mxu0 %v676
  %v706 = vpop.f32.mrf.mxu0
  %v707 = vadd.f32 %v638, %v706
  %v708 = vpop.f32.mrf.mxu0
  %v709 = vadd.f32 %v643, %v708
  %710 = vdwg.mxu0
  %v711 = vmax.f32 %v692, 0.0
  %v712 = vmax.f32 %v694, 0.0
  %v713 = vmax.f32 %v697, 0.0
  %v714 = vmax.f32 %v699, 0.0
  %v715 = vmax.f32 %v702, 0.0
  %v716 = vmax.f32 %v704, 0.0
  %v717 = vmax.f32 %v707, 0.0
  %v718 = vmax.f32 %v709, 0.0
  %v719 = vpack.c.bf16 %v712, %v711
  %v720 = vpack.c.bf16 %v714, %v713
  %v721 = vpack.c.bf16 %v716, %v715
  %v722 = vpack.c.bf16 %v718, %v717
  %v723 = vld [vmem:[%s4] sm:$0xf]
  %v724 = vld [vmem:[%s4 + $0x4] sm:$0xf]
  %v725 = vld [vmem:[%s4 + $0x8] sm:$0xf]
  %v726 = vld [vmem:[%s4 + $0xc] sm:$0xf]
  %v727 = vld [vmem:[%s4 + $0x10] sm:$0xf]
  %v728 = vld [vmem:[%s4 + $0x14] sm:$0xf]
  %v729 = vld [vmem:[%s4 + $0x18] sm:$0xf]
  %v730 = vld [vmem:[%s4 + $0x1c] sm:$0xf]
  %v731 = vld [vmem:[%s5] sm:$0xff]
  %v732 = vld [vmem:[%s5 + $0x8] sm:$0xff]
  %v733 = vld [vmem:[%s5 + $0x10] sm:$0xff]
  %v734 = vld [vmem:[%s5 + $0x18] sm:$0xff]
  %v735 = vld [vmem:[%s5 + $0x20] sm:$0xff]
  %v736 = vld [vmem:[%s5 + $0x28] sm:$0xff]
  %v737 = vld [vmem:[%s5 + $0x30] sm:$0xff]
  %v738 = vld [vmem:[%s5 + $0x38] sm:$0xff]
  %740 = vset.pattern.permute.xlu0 0
  %741 = vperm.xlu0 %740, %v731
  %v742 = vpop.permute.xlu0 %741
  %745 = vset.pattern.permute.xlu0 0
  %746 = vperm.xlu0 %745, %v732
  %v747 = vpop.permute.xlu0 %746
  %750 = vset.pattern.permute.xlu0 0
  %751 = vperm.xlu0 %750, %v733
  %v752 = vpop.permute.xlu0 %751
  %755 = vset.pattern.permute.xlu0 0
  %756 = vperm.xlu0 %755, %v734
  %v757 = vpop.permute.xlu0 %756
  %760 = vset.pattern.permute.xlu0 0
  %761 = vperm.xlu0 %760, %v735
  %v762 = vpop.permute.xlu0 %761
  %765 = vset.pattern.permute.xlu0 0
  %766 = vperm.xlu0 %765, %v736
  %v767 = vpop.permute.xlu0 %766
  %770 = vset.pattern.permute.xlu0 0
  %771 = vperm.xlu0 %770, %v737
  %v772 = vpop.permute.xlu0 %771
  %775 = vset.pattern.permute.xlu0 0
  %776 = vperm.xlu0 %775, %v738
  %v777 = vpop.permute.xlu0 %776
  %v787 = vunpack.c.l.b16 %v723
  %v788 = vunpack.c.l.b16 %v724
  %v789 = vunpack.c.l.b16 %v725
  %v790 = vunpack.c.l.b16 %v726
  %v791 = vunpack.c.l.b16 %v727
  %v792 = vunpack.c.l.b16 %v728
  %v793 = vunpack.c.l.b16 %v729
  %v794 = vunpack.c.l.b16 %v730
  %v795 = vpack.c.b16 %v788, %v787
  %v796 = vpack.c.b16 %v790, %v789
  %v797 = vpack.c.b16 %v792, %v791
  %v798 = vpack.c.b16 %v794, %v793
  %vm799 = vcmask 523264
  %v801 = vsel %vm799, %v795, 0
  %v804 = vsel %vm799, %v796, 0
  %v807 = vsel %vm799, %v797, 0
  %v810 = vsel %vm799, %v798, 0
  %812 = vmatpush.bf16.msra.mxu0 0
  %813 = vmatpush.bf16.msra.mxu0 0
  %814 = vmatpush.bf16.msra.mxu0 0
  %815 = vmatpush.bf16.msra.mxu0 0
  %816 = vmatpush.bf16.msra.mxu0 %v722
  %817 = vmatpush.bf16.msra.mxu0 %v721
  %818 = vmatpush.bf16.msra.mxu0 %v720
  %819 = vmatpush.bf16.msra.mxu0 %v719
  %820 = vmatmul.bf16.gmra.mxu0 %v801
  %v821 = vpop.f32.mrf.mxu0
  %v822 = vadd.f32 %v742, %v821
  %v823 = vpop.f32.mrf.mxu0
  %v824 = vadd.f32 %v747, %v823
  %825 = vmatmul.bf16.gmra.mxu0 %v804
  %v826 = vpop.f32.mrf.mxu0
  %v827 = vadd.f32 %v752, %v826
  %v828 = vpop.f32.mrf.mxu0
  %v829 = vadd.f32 %v757, %v828
  %830 = vmatmul.bf16.gmra.mxu0 %v807
  %v831 = vpop.f32.mrf.mxu0
  %v832 = vadd.f32 %v762, %v831
  %v833 = vpop.f32.mrf.mxu0
  %v834 = vadd.f32 %v767, %v833
  %835 = vmatmul.bf16.gmra.mxu0 %v810
  %v836 = vpop.f32.mrf.mxu0
  %v837 = vadd.f32 %v772, %v836
  %v838 = vpop.f32.mrf.mxu0
  %v839 = vadd.f32 %v777, %v838
  %840 = vdwg.mxu0
  %v841 = vmax.f32 %v822, 0.0
  %v842 = vmax.f32 %v824, 0.0
  %v843 = vmax.f32 %v827, 0.0
  %v844 = vmax.f32 %v829, 0.0
  %v845 = vmax.f32 %v832, 0.0
  %v846 = vmax.f32 %v834, 0.0
  %v847 = vmax.f32 %v837, 0.0
  %v848 = vmax.f32 %v839, 0.0
  %v849 = vpack.c.bf16 %v842, %v841
  %v850 = vpack.c.bf16 %v844, %v843
  %v851 = vpack.c.bf16 %v846, %v845
  %v852 = vpack.c.bf16 %v848, %v847
  %v853 = vld [vmem:[%s6] sm:$0xf]
  %v854 = vld [vmem:[%s6 + $0x4] sm:$0xf]
  %v855 = vld [vmem:[%s6 + $0x8] sm:$0xf]
  %v856 = vld [vmem:[%s6 + $0xc] sm:$0xf]
  %v857 = vld [vmem:[%s6 + $0x10] sm:$0xf]
  %v858 = vld [vmem:[%s6 + $0x14] sm:$0xf]
  %v859 = vld [vmem:[%s6 + $0x18] sm:$0xf]
  %v860 = vld [vmem:[%s6 + $0x1c] sm:$0xf]
  %v861 = vld [vmem:[%s7] sm:$0xff]
  %v862 = vld [vmem:[%s7 + $0x8] sm:$0xff]
  %v863 = vld [vmem:[%s7 + $0x10] sm:$0xff]
  %v864 = vld [vmem:[%s7 + $0x18] sm:$0xff]
  %v865 = vld [vmem:[%s7 + $0x20] sm:$0xff]
  %v866 = vld [vmem:[%s7 + $0x28] sm:$0xff]
  %v867 = vld [vmem:[%s7 + $0x30] sm:$0xff]
  %v868 = vld [vmem:[%s7 + $0x38] sm:$0xff]
  %870 = vset.pattern.permute.xlu0 0
  %871 = vperm.xlu0 %870, %v861
  %v872 = vpop.permute.xlu0 %871
  %875 = vset.pattern.permute.xlu0 0
  %876 = vperm.xlu0 %875, %v862
  %v877 = vpop.permute.xlu0 %876
  %880 = vset.pattern.permute.xlu0 0
  %881 = vperm.xlu0 %880, %v863
  %v882 = vpop.permute.xlu0 %881
  %885 = vset.pattern.permute.xlu0 0
  %886 = vperm.xlu0 %885, %v864
  %v887 = vpop.permute.xlu0 %886
  %890 = vset.pattern.permute.xlu0 0
  %891 = vperm.xlu0 %890, %v865
  %v892 = vpop.permute.xlu0 %891
  %895 = vset.pattern.permute.xlu0 0
  %896 = vperm.xlu0 %895, %v866
  %v897 = vpop.permute.xlu0 %896
  %900 = vset.pattern.permute.xlu0 0
  %901 = vperm.xlu0 %900, %v867
  %v902 = vpop.permute.xlu0 %901
  %905 = vset.pattern.permute.xlu0 0
  %906 = vperm.xlu0 %905, %v868
  %v907 = vpop.permute.xlu0 %906
  %v917 = vunpack.c.l.b16 %v853
  %v918 = vunpack.c.l.b16 %v854
  %v919 = vunpack.c.l.b16 %v855
  %v920 = vunpack.c.l.b16 %v856
  %v921 = vunpack.c.l.b16 %v857
  %v922 = vunpack.c.l.b16 %v858
  %v923 = vunpack.c.l.b16 %v859
  %v924 = vunpack.c.l.b16 %v860
  %v925 = vpack.c.b16 %v918, %v917
  %v926 = vpack.c.b16 %v920, %v919
  %v927 = vpack.c.b16 %v922, %v921
  %v928 = vpack.c.b16 %v924, %v923
  %v930 = vsel %vm799, %v925, 0
  %v933 = vsel %vm799, %v926, 0
  %v936 = vsel %vm799, %v927, 0
  %v939 = vsel %vm799, %v928, 0
  %941 = vmatpush.bf16.msra.mxu0 0
  %942 = vmatpush.bf16.msra.mxu0 0
  %943 = vmatpush.bf16.msra.mxu0 0
  %944 = vmatpush.bf16.msra.mxu0 0
  %945 = vmatpush.bf16.msra.mxu0 %v852
  %946 = vmatpush.bf16.msra.mxu0 %v851
  %947 = vmatpush.bf16.msra.mxu0 %v850
  %948 = vmatpush.bf16.msra.mxu0 %v849
  %949 = vmatmul.bf16.gmra.mxu0 %v930
  %v950 = vpop.f32.mrf.mxu0
  %v951 = vadd.f32 %v872, %v950
  %v952 = vpop.f32.mrf.mxu0
  %v953 = vadd.f32 %v877, %v952
  %954 = vmatmul.bf16.gmra.mxu0 %v933
  %v955 = vpop.f32.mrf.mxu0
  %v956 = vadd.f32 %v882, %v955
  %v957 = vpop.f32.mrf.mxu0
  %v958 = vadd.f32 %v887, %v957
  %959 = vmatmul.bf16.gmra.mxu0 %v936
  %v960 = vpop.f32.mrf.mxu0
  %v961 = vadd.f32 %v892, %v960
  %v962 = vpop.f32.mrf.mxu0
  %v963 = vadd.f32 %v897, %v962
  %964 = vmatmul.bf16.gmra.mxu0 %v939
  %v965 = vpop.f32.mrf.mxu0
  %v966 = vadd.f32 %v902, %v965
  %v967 = vpop.f32.mrf.mxu0
  %v968 = vadd.f32 %v907, %v967
  %969 = vdwg.mxu0
  %v970 = vmax.f32 %v951, 0.0
  %v971 = vmax.f32 %v953, 0.0
  %v972 = vmax.f32 %v956, 0.0
  %v973 = vmax.f32 %v958, 0.0
  %v974 = vmax.f32 %v961, 0.0
  %v975 = vmax.f32 %v963, 0.0
  %v976 = vmax.f32 %v966, 0.0
  %v977 = vmax.f32 %v968, 0.0
  %v978 = vpack.c.bf16 %v971, %v970
  %v979 = vpack.c.bf16 %v973, %v972
  %v980 = vpack.c.bf16 %v975, %v974
  %v981 = vpack.c.bf16 %v977, %v976
  %v982 = vld [vmem:[%s8] sm:$0x3]
  %v983 = vld [vmem:[%s9] sm:$0x7]
  %985 = vset.pattern.permute.xlu0 0
  %986 = vperm.xlu0 %985, %v983
  %v987 = vpop.permute.xlu0 %986
  %v990 = vsel %vm799, %v982, 0
  %992 = vmatpush.bf16.msra.mxu0 0
  %993 = vmatpush.bf16.msra.mxu0 0
  %994 = vmatpush.bf16.msra.mxu0 0
  %995 = vmatpush.bf16.msra.mxu0 0
  %996 = vmatpush.bf16.msra.mxu0 %v981
  %997 = vmatpush.bf16.msra.mxu0 %v980
  %998 = vmatpush.bf16.msra.mxu0 %v979
  %999 = vmatpush.bf16.msra.mxu0 %v978
  %1000 = vmatmul.bf16.gmra.mxu0 %v990
  %v1001 = vpop.f32.mrf.mxu0
  %v1002 = vadd.f32 %v987, %v1001
  %v1003 = vpop.f32.mrf.mxu0
  %1004 = vdwg.mxu0
  %1005 = vst [vmem:[%s10] sm:$0x7] %v40
  %v1007 = vrot.slane %v583, 7
  %v1010 = vrot.slane %v587, 6
  %vm1012 = vcmask 1040384
  %v1013 = vsel %vm1012, %v578, %v1007
  %vm1014 = vcmask 1041408
  %v1015 = vsel %vm1014, %v1013, %v1010
  %v1016 = vadd.f32 %v1015, %v1002
  %1017 = vst [vmem:[%s10 + $0x3] sm:$0x7] %v1016
  // Predicated region
  $region42: #{hybrid_dynamics_forward.1} parent=0 // pred_check
    _
  $region43: #{hybrid_dynamics_forward.1} parent=0 // pred_check_branch
    %1019 = sbr.rel (0) target = $region45
  $region44: #{hybrid_dynamics_forward.1} parent=0 // pred_region
    _
  $region45: #{hybrid_dynamics_forward.1} parent=0 // pred_fallthru
    _
  // Predicated region
  $region46: #{hybrid_dynamics_forward.1} parent=0 // pred_check
    _
  $region47: #{hybrid_dynamics_forward.1} parent=0 // pred_check_branch
    %1021 = sbr.rel (0) target = $region49
  $region48: #{hybrid_dynamics_forward.1} parent=0 // pred_region
    _
  $region49: #{hybrid_dynamics_forward.1} parent=0 // pred_fallthru
    _

</llo_original>
